<compile_context>
chip_gen: v7x
topology: tpu7x:2x2x1
jax: 0.10.0
libtpu: 0.0.40
codegen_flags: <defaults>
</compile_context>

<pallas_src>
import jax
import jax.numpy as jnp
from jax.experimental import pallas as pl
from jax.experimental.pallas import tpu as pltpu


# ----------------------------------------------------------------------------
# Pallas kernels
# ----------------------------------------------------------------------------

def _gate_kernel(x_ref, w_ref, o_ref):
    # x_ref: (tr, tl); w_ref: (tr, 1) per-row scale broadcast along lanes.
    o_ref[...] = (x_ref[...] * w_ref[...]).astype(o_ref.dtype)


def _gate_bias_kernel(x_ref, wb_ref, o_ref):
    # wb_ref: (tr, 2) -> column 0 = per-row scale, column 1 = per-row shift.
    wb = wb_ref[...]
    o_ref[...] = (x_ref[...] * wb[:, 0:1] + wb[:, 1:2]).astype(o_ref.dtype)


# ----------------------------------------------------------------------------
# Wrapper
# ----------------------------------------------------------------------------

def _round_up(n, m):
    return ((n + m - 1) // m) * m


def _cdiv(n, m):
    return (n + m - 1) // m


def soft_gating(x, weight, bias=None, *,
                target_block_bytes=4 << 20,   # ~4 MiB per block (any dtype)
                max_block_rows=512,
                min_pallas_bytes=1 << 20):
    """y = weight * x (+ bias), weight/bias broadcast per channel.

    x: (B, C, *spatial); weight / bias: any shape with C elements.
    """
    B, C = int(x.shape[0]), int(x.shape[1])
    L = 1
    for s in x.shape[2:]:
        L *= int(s)
    R = B * C
    dtype = x.dtype
    itemsize = jnp.dtype(dtype).itemsize

    w = jnp.asarray(weight, dtype).reshape(-1)
    assert w.shape[0] == C, "weight must have in_features elements"
    b = None
    if bias is not None:
        b = jnp.asarray(bias, dtype).reshape(-1)
        assert b.shape[0] == C, "bias must have in_features elements"

    # Tiny inputs: pallas_call launch overhead dominates and XLA fuses the
    # broadcast-multiply for free.
    if R * L * itemsize < min_pallas_bytes:
        bc = (1, C) + (1,) * (x.ndim - 2)
        y = w.reshape(bc) * x
        if b is not None:
            y = y + b.reshape(bc)
        return y

    # (B, C, *spatial) -> (B*C, prod(spatial)): pure reshape, channels on the
    # sublane axis, spatial on the lane axis (lane-dense output, no transpose).
    x2 = x.reshape(R, L)

    # Per-row gate column(s): row r of x2 is channel r % C.  With bias, pack
    # weight and bias into a single (R, 2) column -> one tiny DMA per block.
    if b is None:
        cols = jnp.tile(w.reshape(1, C), (B, 1)).reshape(R, 1)
        ncol = 1
        kernel = _gate_kernel
    else:
        wb = jnp.stack([w, b], axis=-1)                      # (C, 2)
        cols = jnp.tile(wb.reshape(1, C, 2), (B, 1, 1)).reshape(R, 2)
        ncol = 2
        kernel = _gate_bias_kernel

    # Dtype-aware tile selection: sublane multiple 8/16/32 for 4/2/1-byte
    # dtypes; lane extent chosen so a block stays ~target_block_bytes.
    sub = max(8, 32 // itemsize)
    lane = 128
    row_cap = max(sub, (max_block_rows // sub) * sub)
    tr = min(_round_up(R, sub), row_cap)
    tl_cap = _round_up(L, lane)
    tl = max(lane, (target_block_bytes // (tr * itemsize)) // lane * lane)
    tl = min(tl, tl_cap)

    # Megacore balance (v7x has 2 TensorCores): make sure the parallel grid
    # has at least 2 blocks when the data allows it (split lanes first).
    for _ in range(8):
        if _cdiv(R, tr) * _cdiv(L, tl) >= 2:
            break
        new_tl = max(lane, _round_up((tl + 1) // 2, lane))
        if new_tl < tl and _cdiv(L, new_tl) > _cdiv(L, tl):
            tl = new_tl
            continue
        new_tr = max(sub, _round_up((tr + 1) // 2, sub))
        if new_tr < tr and _cdiv(R, new_tr) > _cdiv(R, tr):
            tr = new_tr
            continue
        break

    grid = (_cdiv(R, tr), _cdiv(L, tl))

    out = pl.pallas_call(
        kernel,
        out_shape=jax.ShapeDtypeStruct((R, L), dtype),
        grid_spec=pltpu.PrefetchScalarGridSpec(
            num_scalar_prefetch=0,
            grid=grid,
            in_specs=[pl.BlockSpec((tr, tl), lambda i, j: (i, j)),
                      pl.BlockSpec((tr, ncol), lambda i, j: (i, 0))],
            out_specs=pl.BlockSpec((tr, tl), lambda i, j: (i, j)),
        ),
        compiler_params=pltpu.CompilerParams(
            # Both axes independent -> megacore-shardable on v7x.
            dimension_semantics=("parallel", "parallel"),
            # ~4 MiB blocks, double-buffered in + out ~= 17 MiB resident;
            # 48 MiB fits v7x's 64 MiB/TC and is needed on v5e (16 MiB default).
            vmem_limit_bytes=48 * 1024 * 1024,
        ),
    )(x2, cols)

    return out.reshape(x.shape)


class SoftGating:
    """JAX/Pallas port of the PyTorch SoftGating module (forward only)."""

    def __init__(self, in_features, out_features=None, n_dim=2, bias=False):
        if out_features is not None and in_features != out_features:
            raise ValueError(
                f"Got in_features={in_features} and out_features={out_features}"
                "but these two must be the same for soft-gating")
        self.in_features = in_features
        self.out_features = out_features
        self.n_dim = n_dim
        # reset_parameters(): weight (and bias, if present) init to ones.
        self.weight = jnp.ones((1, in_features) + (1,) * n_dim, jnp.float32)
        self.bias = (jnp.ones((1, in_features) + (1,) * n_dim, jnp.float32)
                     if bias else None)

    def __call__(self, x):
        return soft_gating(x, self.weight, self.bias)


# ----------------------------------------------------------------------------
# Pure-JAX reference (same math, no Pallas)
# ----------------------------------------------------------------------------

def ref_soft_gating(x, weight, bias=None):
    bc = (1, -1) + (1,) * (x.ndim - 2)
    y = jnp.asarray(weight, x.dtype).reshape(bc) * x
    if bias is not None:
        y = y + jnp.asarray(bias, x.dtype).reshape(bc)
    return y


# ----------------------------------------------------------------------------

if __name__ == "__main__":
    key = jax.random.PRNGKey(0)
    k1, k2, k3, k4 = jax.random.split(key, 4)

    # Case 1: module defaults (n_dim=2, bias=False, weight = ones) on a tiny
    # input -> fused pure-JAX fast path; output equals input.
    x1 = jax.random.normal(k1, (2, 4, 16, 16), jnp.float32)
    gate = SoftGating(in_features=4, n_dim=2, bias=False)
    out1 = jax.block_until_ready(gate(x1))
    assert out1.shape == x1.shape, out1.shape
    err1 = float(jnp.max(jnp.abs(out1 - ref_soft_gating(x1, gate.weight))))
    assert err1 < 1e-6, f"case1 max abs diff: {err1}"

    # Case 2: ragged (non-8/128-aligned) shape with bias, Pallas path forced:
    # exercises the cdiv grid + boundary masking and the packed (R, 2) column.
    x2 = jax.random.normal(k2, (3, 5, 17, 19), jnp.float32)
    w2 = jax.random.normal(k3, (5,), jnp.float32)
    b2 = jax.random.normal(k4, (5,), jnp.float32)
    out2 = jax.block_until_ready(soft_gating(x2, w2, b2, min_pallas_bytes=0))
    err2 = float(jnp.max(jnp.abs(out2 - ref_soft_gating(x2, w2, b2))))
    assert err2 < 1e-5, f"case2 max abs diff: {err2}"

    # Case 3: aligned no-bias case, Pallas path forced: exercises the
    # megacore >=2-block split (grid becomes (1, 2)).
    x3 = jax.random.normal(k1, (2, 8, 32, 128), jnp.float32)
    w3 = jax.random.normal(k2, (8,), jnp.float32)
    out3 = jax.block_until_ready(soft_gating(x3, w3, min_pallas_bytes=0))
    err3 = float(jnp.max(jnp.abs(out3 - ref_soft_gating(x3, w3))))
    assert err3 < 1e-5, f"case3 max abs diff: {err3}"

    # Case 4: bf16 input with bias, Pallas path forced: exercises the
    # dtype-aware sublane (16) / lane tile selection.
    x4 = jax.random.normal(k3, (2, 8, 32, 128), jnp.float32).astype(jnp.bfloat16)
    w4 = jax.random.normal(k4, (8,), jnp.float32)
    b4 = jax.random.normal(k1, (8,), jnp.float32)
    out4 = jax.block_until_ready(soft_gating(x4, w4, b4, min_pallas_bytes=0))
    ref4 = ref_soft_gating(x4, w4, b4)
    err4 = float(jnp.max(jnp.abs(out4.astype(jnp.float32) -
                                 ref4.astype(jnp.float32))))
    assert err4 < 5e-2, f"case4 max abs diff: {err4}"

    # Case 5: Pallas path reached naturally (above the tiny-input cutoff),
    # multi-block parallel grid.
    x5 = jax.random.normal(k2, (4, 32, 64, 64), jnp.float32)
    w5 = jax.random.normal(k3, (32,), jnp.float32)
    out5 = jax.block_until_ready(soft_gating(x5, w5))
    err5 = float(jnp.max(jnp.abs(out5 - ref_soft_gating(x5, w5))))
    assert err5 < 1e-5, f"case5 max abs diff: {err5}"

    print("KERNEL_OK")
</pallas_src>

<mosaic_0001>
module attributes {stable_mosaic.version = 11 : i64} {
  func.func @_gate_bias_kernel(%arg0: i32, %arg1: i32, %arg2: memref<16x256xf32, #tpu.memory_space<vmem>>, %arg3: memref<16x2xf32, #tpu.memory_space<vmem>>, %arg4: memref<16x256xf32, #tpu.memory_space<vmem>>) attributes {dimension_semantics = [#tpu.dimension_semantics<parallel>, #tpu.dimension_semantics<parallel>], iteration_bounds = array<i64: 1, 2>, scalar_prefetch = 0 : i64, scratch_operands = 0 : i64, tpu.core_type = #tpu.core_type<tc>, window_params = [{transform_indices = @transform_0, window_bounds = array<i64: 16, 256>}, {transform_indices = @transform_1, window_bounds = array<i64: 16, 2>}, {transform_indices = @transform_2, window_bounds = array<i64: 16, 256>}]} {
    %c0 = arith.constant 0 : index
    %c0_0 = arith.constant 0 : index
    %0 = vector.load %arg3[%c0, %c0_0] : memref<16x2xf32, #tpu.memory_space<vmem>>, vector<16x2xf32>
    %c0_1 = arith.constant 0 : index
    %c0_2 = arith.constant 0 : index
    %1 = vector.load %arg2[%c0_1, %c0_2] : memref<16x256xf32, #tpu.memory_space<vmem>>, vector<16x256xf32>
    %2 = vector.extract_strided_slice %0 {offsets = [0, 0], sizes = [16, 1], strides = [1, 1]} : vector<16x2xf32> to vector<16x1xf32>
    %3 = vector.broadcast %2 : vector<16x1xf32> to vector<16x256xf32>
    %4 = arith.mulf %1, %3 : vector<16x256xf32>
    %5 = vector.extract_strided_slice %0 {offsets = [0, 1], sizes = [16, 1], strides = [1, 1]} : vector<16x2xf32> to vector<16x1xf32>
    %6 = vector.broadcast %5 : vector<16x1xf32> to vector<16x256xf32>
    %7 = arith.addf %4, %6 : vector<16x256xf32>
    %c0_3 = arith.constant 0 : index
    %c0_4 = arith.constant 0 : index
    %8 = vector.load %arg4[%c0_3, %c0_4] : memref<16x256xf32, #tpu.memory_space<vmem>>, vector<16x256xf32>
    tpu.vector_store %arg4[%c0_3, %c0_4], %7 {strides = array<i32>} : memref<16x256xf32, #tpu.memory_space<vmem>>, vector<16x256xf32>,
    return
  }
  func.func @transform_0(%arg0: i32, %arg1: i32) -> (i32, i32) {
    %c0_i32 = arith.constant 0 : i32
    return %arg0, %arg1 : i32, i32
  }
  func.func @transform_1(%arg0: i32, %arg1: i32) -> (i32, i32) {
    %c0_i32 = arith.constant 0 : i32
    %c0_i32_0 = arith.constant 0 : i32
    return %arg0, %c0_i32 : i32, i32
  }
  func.func @transform_2(%arg0: i32, %arg1: i32) -> (i32, i32) {
    %c0_i32 = arith.constant 0 : i32
    return %arg0, %arg1 : i32, i32
  }
}

</mosaic_0001>

<llo_original>
// kernel: tpu_custom_call.1
$region0: #{tpu_custom_call.1}
  #allocation0 [shape = 'u32[]', space=smem, size = 0x4, offset = 0x4, fixed_abs, tag = 'smem constant byte address 0x4 - core index']
  #allocation1 [shape = 'u32[144,128]{1,0:T(1,128)}', space=vmem, size = 0x12000, scoped, tag = 'internal scratch']
  %s0 = inlined_call_operand.hbm [shape: f32[15,323], index: 0, kind: input, shape index: {}]
  %s1 = inlined_call_operand.vmem [shape: f32[15,2], index: 1, kind: input, shape index: {}]
  %s2 = inlined_call_operand.hbm [shape: f32[15,323], index: 2, kind: output, shape index: {}]
  %s3 = sld [smem:[#allocation0]]
  $region45: #{tpu_custom_call.1} parent=0
    _
  %s5 = ssub.s32 1, %s3
  %s6 = scalar_select 0, %s5, %s3
  $region1: #{tpu_custom_call.1} parent=0
    #allocation2 [shape = 'u8[32768]{0}', space=vmem, size = 0x8000, scoped, tag = 'input window, operand 0']
    #allocation3 [shape = 's32[2]{0}', space=sflag, size = 0x8, scoped, tag = 'scoped memory for tpu_custom_call.1']
    #allocation4 [shape = 's32[2]{0}', space=sflag, size = 0x8, scoped, tag = 'scoped memory for tpu_custom_call.1']
    #allocation5 [shape = 'u8[32768]{0}', space=vmem, size = 0x8000, scoped, tag = 'output window, operand 0']
    %7 = vsyncpa [#allocation3], 0
    %s8 = scalar_lea.sflag [#allocation3], 1
    %9 = vsyncpa %s8, 0
    %10 = vsyncpa [#allocation4], 0
    %s11 = scalar_lea.sflag [#allocation4], 1
    %12 = vsyncpa %s11, 0
    loop: start=0, step=1, limit=4
    $region2: #{tpu_custom_call.1} parent=1 // loop_pre_header
      _
    $region3: #{tpu_custom_call.1} parent=1 // loop_header
      %s14 = sphi 0, %s18
      %p15 = scmp.ge.s32.totalorder %s14, 4
      %s21 = sphi 0, %s33
      %s22 = sphi 0, %s29
      %s23 = sphi 0, %s21
      %s24 = sphi 0, %s22
      %s25 = sphi 0, %s23
      %s26 = sphi 0, %s24
      %s38 = sphi 0, %s40
      %s41 = sphi 0, %s38
      %s42 = sphi 0, %s41
      %s58 = sphi 0, %s42
      %s64 = sphi 0, %s66
      %s67 = sphi 0, %s64
      %s68 = sphi 0, %s67
      %s84 = sphi 0, %s68
      %s92 = sphi 0, %s94
      %s95 = sphi 0, %s92
      %s96 = sphi 0, %s95
      %s112 = sphi 0, %s96
    $region4: #{tpu_custom_call.1} parent=1 // loop_header_branch
      %17 = sbr.rel (%p15) target = $region8
    $region5: #{tpu_custom_call.1} parent=1 // loop_body
      %s19 = ssub.s32 %s14, 1
      %s20 = ssub.s32 %s14, 2
      %s27 = sadd.s32 1, %s22
      %p28 = scmp.ge.s32.totalorder %s27, 2
      %s29 = scalar_select %p28, 0, %s27
      %s30 = sadd.s32 1, %s21
      %s31 = scalar_select %p28, %s30, %s21
      %p32 = scmp.ge.s32.totalorder %s31, 1
      %s33 = scalar_select %p32, 0, %s31
      %s34 = ssub.s32 %s21, %s33
      %s35 = ssub.s32 %s22, %s29
      %s36 = sor.u32 %s34, %s35
      %p37 = scmp.eq.s32.totalorder %s36, 0
      %s39 = sadd.s32 %s38, 1
      %s40 = scalar_select %p37, %s38, %s39
      %p43 = pneg %p37
      %p44 = scmp.eq.s32.totalorder %s14, 1
      %p45 = por %p43, %p44
      %p46 = scmp.ne.s32.totalorder %s38, %s41
      %p47 = scmp.eq.s32.totalorder %s14, 0
      %p48 = por %p46, %p47
      %p49 = scmp.ne.s32.totalorder %s38, %s41
      %p50 = scmp.eq.s32.totalorder %s19, 1
      %p51 = por %p49, %p50
      %p52 = scmp.ne.s32.totalorder %s41, %s42
      %p53 = scmp.eq.s32.totalorder %s19, 0
      %p54 = por %p52, %p53
      %p55 = scmp.ne.s32.totalorder %s41, %s42
      %p56 = scmp.eq.s32.totalorder %s20, 1
      %p57 = por %p55, %p56
      %p59 = scmp.ne.s32.totalorder %s42, %s58
      %p60 = scmp.eq.s32.totalorder %s20, 0
      %p61 = por %p59, %p60
      %s62 = ssub.s32 %s21, %s33
      %p63 = scmp.eq.s32.totalorder %s62, 0
      %s65 = sadd.s32 %s64, 1
      %s66 = scalar_select %p63, %s64, %s65
      %p69 = pneg %p63
      %p70 = scmp.eq.s32.totalorder %s14, 1
      %p71 = por %p69, %p70
      %p72 = scmp.ne.s32.totalorder %s64, %s67
      %p73 = scmp.eq.s32.totalorder %s14, 0
      %p74 = por %p72, %p73
      %p75 = scmp.ne.s32.totalorder %s64, %s67
      %p76 = scmp.eq.s32.totalorder %s19, 1
      %p77 = por %p75, %p76
      %p78 = scmp.ne.s32.totalorder %s67, %s68
      %p79 = scmp.eq.s32.totalorder %s19, 0
      %p80 = por %p78, %p79
      %p81 = scmp.ne.s32.totalorder %s67, %s68
      %p82 = scmp.eq.s32.totalorder %s20, 1
      %p83 = por %p81, %p82
      %p85 = scmp.ne.s32.totalorder %s68, %s84
      %p86 = scmp.eq.s32.totalorder %s20, 0
      %p87 = por %p85, %p86
      %s88 = ssub.s32 %s21, %s33
      %s89 = ssub.s32 %s22, %s29
      %s90 = sor.u32 %s88, %s89
      %p91 = scmp.eq.s32.totalorder %s90, 0
      %s93 = sadd.s32 %s92, 1
      %s94 = scalar_select %p91, %s92, %s93
      %p97 = pneg %p91
      %p98 = scmp.eq.s32.totalorder %s14, 1
      %p99 = por %p97, %p98
      %p100 = scmp.ne.s32.totalorder %s92, %s95
      %p101 = scmp.eq.s32.totalorder %s14, 0
      %p102 = por %p100, %p101
      %p103 = scmp.ne.s32.totalorder %s92, %s95
      %p104 = scmp.eq.s32.totalorder %s19, 1
      %p105 = por %p103, %p104
      %p106 = scmp.ne.s32.totalorder %s95, %s96
      %p107 = scmp.eq.s32.totalorder %s19, 0
      %p108 = por %p106, %p107
      %p109 = scmp.ne.s32.totalorder %s95, %s96
      %p110 = scmp.eq.s32.totalorder %s20, 1
      %p111 = por %p109, %p110
      %p113 = scmp.ne.s32.totalorder %s96, %s112
      %p114 = scmp.eq.s32.totalorder %s20, 0
      %p115 = por %p113, %p114
      %p116 = scmp.le.s32.totalorder 1, %s14
      %p117 = scmp.lt.s32.totalorder %s14, 3
      %p118 = pnand %p116, %p117
      %p119 = pneg %p118
      // Predicated region
      $region9: #{tpu_custom_call.1} parent=5 // pred_check
        _
      $region10: #{tpu_custom_call.1} parent=5 // pred_check_branch
        %121 = sbr.rel (%p118) target = $region12
      $region11: #{tpu_custom_call.1} parent=5 // pred_region
        %s122 = ssub.s32 %s14, 1
        // Predicated region
        $region13: #{tpu_custom_call.1} parent=11 // pred_check
          %p123 = pneg %p80
        $region14: #{tpu_custom_call.1} parent=11 // pred_check_branch
          %125 = sbr.rel (%p123) target = $region16
        $region15: #{tpu_custom_call.1} parent=11 // pred_region
          %s126 = smul.u32 2, %s23
          %p127 = scmp.lt.s32.totalorder %s126, 1
          %s128 = scalar_select %p127, %s126, 1
          %s129 = smul.addr %s128, 8
          %s130 = scalar_lea.vmem %s1, %s129
          %s131 = smul.u32 2, %s23
        $region16: #{tpu_custom_call.1} parent=11 // pred_fallthru
          _
      $region12: #{tpu_custom_call.1} parent=5 // pred_fallthru
        _
      %p132 = scmp.lt.s32.totalorder %s14, 2
      // Predicated region
      $region17: #{tpu_custom_call.1} parent=5 // pred_check
        %p133 = pneg %p132
      $region18: #{tpu_custom_call.1} parent=5 // pred_check_branch
        %135 = sbr.rel (%p133) target = $region20
      $region19: #{tpu_custom_call.1} parent=5 // pred_region
        // Predicated region
        $region21: #{tpu_custom_call.1} parent=19 // pred_check
          %p136 = pneg %p48
        $region22: #{tpu_custom_call.1} parent=19 // pred_check_branch
          %138 = sbr.rel (%p136) target = $region24
        $region23: #{tpu_custom_call.1} parent=19 // pred_region
          %s139 = sand.u32 %s38, 1
          %s140 = scalar_lea.sflag [#allocation3], %s139
          %s141 = sand.u32 %s38, 1
          %s142 = smul.addr %s141, 32
          %s143 = scalar_lea.vmem [#allocation2], %s142
          %s144 = smul.u32 2, %s21
          %s145 = smul.u32 2, %s22
          %s146 = ssub.s32 3, %s145
          %p147 = scmp.lt.s32.totalorder %s146, 2
          %s148 = scalar_select %p147, %s146, 2
          %s149 = smul.u32 256, %s148
          %s151 = ssub.s32 512, %s149
          %152 = vsyncadd %s140, %s151
          %p153 = scmp.ne.s32.totalorder 0, %s149
          %s154 = smul.addr %s144, 3
          %s155 = sadd.s32 %s145, %s154
          %s156 = smul.addr %s155, 128
          %s157 = scalar_lea.hbm %s0, %s156
          %s158 = smul.u32 %s148, 8
          %s159 = smul.u32 %s158, 2
          %s160 = sshll.u32 %s143, 4
          %s161 = int_to_ptr.vmem [resolvable:$true] %s160
          %s162 = sshll.u32 %s159, 4
          %166 = dma.hbm_to_vmem [thread:$0]  (%p153), %s157, %s162, %s161, %s140, 384, 256, %s158
        $region24: #{tpu_custom_call.1} parent=19 // pred_fallthru
          _
      $region20: #{tpu_custom_call.1} parent=5 // pred_fallthru
        _
      %p167 = scmp.le.s32.totalorder 1, %s14
      %p168 = scmp.lt.s32.totalorder %s14, 3
      %p169 = pnand %p167, %p168
      %p170 = pneg %p169
      // Predicated region
      $region25: #{tpu_custom_call.1} parent=5 // pred_check
        _
      $region26: #{tpu_custom_call.1} parent=5 // pred_check_branch
        %172 = sbr.rel (%p169) target = $region28
      $region27: #{tpu_custom_call.1} parent=5 // pred_region
        %s173 = ssub.s32 %s14, 1
        %s174 = sand.u32 %s41, 1
        %s175 = scalar_lea.sflag [#allocation3], %s174
        %s176 = sand.u32 %s41, 1
        %s177 = smul.addr %s176, 32
        %s178 = scalar_lea.vmem [#allocation2], %s177
        // Predicated region
        $region29: #{tpu_custom_call.1} parent=27 // pred_check
          %p179 = pneg %p54
        $region30: #{tpu_custom_call.1} parent=27 // pred_check_branch
          %181 = sbr.rel (%p179) target = $region32
        $region31: #{tpu_custom_call.1} parent=27 // pred_region
          %182 = dma.done %s175, 512
        $region32: #{tpu_custom_call.1} parent=27 // pred_fallthru
          _
        %s183 = sand.u32 %s41, 1
        %s184 = scalar_lea.sflag [#allocation3], %s183
        %s185 = sand.u32 %s41, 1
        %s186 = smul.addr %s185, 32
        %s187 = scalar_lea.vmem [#allocation2], %s186
        %p188 = pneg %p54
        %p189 = pneg %p51
        %s190 = smul.u32 2, %s23
        %p191 = scmp.lt.s32.totalorder %s190, 1
        %s192 = scalar_select %p191, %s190, 1
        %s193 = smul.addr %s192, 8
        %s194 = scalar_lea.vmem %s1, %s193
        %p195 = pneg %p80
        %p196 = pneg %p77
        %p197 = pneg %p108
        %p198 = pneg %p105
        %s199 = sand.u32 %s95, 1
        %s200 = scalar_lea.sflag [#allocation4], %s199
        %s201 = sand.u32 %s95, 1
        %s202 = smul.addr %s201, 32
        %s203 = scalar_lea.vmem [#allocation5], %s202
        %s204 = smul.u32 2, %s23
        %s205 = smul.u32 2, %s24
        %s206 = ssub.s32 3, %s205
        %p207 = scmp.lt.s32.totalorder %s206, 2
        %s208 = scalar_select %p207, %s206, 2
        %s209 = smul.u32 256, %s208
        %s210 = smul.u32 2, %s23
        %p211 = scmp.lt.s32.totalorder %s210, 1
        %s212 = scalar_select %p211, %s210, 1
        %s213 = smul.addr %s212, 8
        %s214 = scalar_lea.vmem %s1, %s213
        %s215 = smul.u32 2, %s23
        %s216 = smul.u32 2, %s23
        %s217 = smul.u32 2, %s24
        %s218 = ssub.s32 3, %s217
        %p219 = scmp.lt.s32.totalorder %s218, 2
        %s220 = scalar_select %p219, %s218, 2
        %s221 = smul.u32 256, %s220
        %v222 = vld [vmem:[%s214] sm:$0xff]
        %v223 = vld [vmem:[%s214 + $0x8] sm:$0xff]
        %v224 = vld [vmem:[%s178] sm:$0xff]
        %v225 = vld [vmem:[%s178 + $0x8] sm:$0xff]
        %v226 = vld [vmem:[%s178 + $0x10] sm:$0xff]
        %v227 = vld [vmem:[%s178 + $0x18] sm:$0xff]
        %229 = vset.pattern.permute.xlu0 0
        %230 = vperm.xlu0 %229, %v222
        %v231 = vpop.permute.xlu0 %230
        %234 = vset.pattern.permute.xlu0 0
        %235 = vperm.xlu0 %234, %v223
        %v236 = vpop.permute.xlu0 %235
        %v238 = vmul.f32 %v224, %v231
        %v239 = vmul.f32 %v225, %v231
        %v240 = vmul.f32 %v226, %v236
        %v241 = vmul.f32 %v227, %v236
        %242 = vset.pattern.permute.xlu0 1
        %243 = vperm.xlu0 %242, %v222
        %v244 = vpop.permute.xlu0 %243
        %246 = vset.pattern.permute.xlu0 1
        %247 = vperm.xlu0 %246, %v223
        %v248 = vpop.permute.xlu0 %247
        %v250 = vadd.f32 %v238, %v244
        %v251 = vadd.f32 %v239, %v244
        %v252 = vadd.f32 %v240, %v248
        %v253 = vadd.f32 %v241, %v248
        %254 = vst [vmem:[%s203] sm:$0xff] %v250
        %255 = vst [vmem:[%s203 + $0x8] sm:$0xff] %v251
        %256 = vst [vmem:[%s203 + $0x10] sm:$0xff] %v252
        %257 = vst [vmem:[%s203 + $0x18] sm:$0xff] %v253
        %s258 = sand.u32 %s95, 1
        %s259 = scalar_lea.sflag [#allocation4], %s258
        %s260 = sand.u32 %s95, 1
        %s261 = smul.addr %s260, 32
        %s262 = scalar_lea.vmem [#allocation5], %s261
        // Predicated region
        $region33: #{tpu_custom_call.1} parent=27 // pred_check
          %p263 = pneg %p105
        $region34: #{tpu_custom_call.1} parent=27 // pred_check_branch
          %265 = sbr.rel (%p263) target = $region36
        $region35: #{tpu_custom_call.1} parent=27 // pred_region
          %s266 = smul.u32 2, %s23
          %s267 = smul.u32 2, %s24
          %s268 = ssub.s32 3, %s267
          %p269 = scmp.lt.s32.totalorder %s268, 2
          %s270 = scalar_select %p269, %s268, 2
          %s271 = smul.u32 256, %s270
          %s273 = ssub.s32 512, %s271
          %274 = vsyncadd %s259, %s273
          %p275 = scmp.ne.s32.totalorder 0, %s271
          %s276 = smul.addr %s266, 3
          %s277 = sadd.s32 %s267, %s276
          %s278 = smul.addr %s277, 128
          %s279 = scalar_lea.hbm %s2, %s278
          %s280 = smul.u32 %s270, 8
          %s281 = smul.u32 %s280, 2
          %s282 = sshll.u32 %s262, 4
          %s283 = int_to_ptr.vmem [resolvable:$true] %s282
          %s284 = sshll.u32 %s281, 4
          %288 = dma.vmem_to_hbm [thread:$0]  (%p275), %s283, %s284, %s279, %s259, 256, 384, %s280
        $region36: #{tpu_custom_call.1} parent=27 // pred_fallthru
          _
      $region28: #{tpu_custom_call.1} parent=5 // pred_fallthru
        _
      %p289 = scmp.le.s32.totalorder 2, %s14
      // Predicated region
      $region37: #{tpu_custom_call.1} parent=5 // pred_check
        %p290 = pneg %p289
      $region38: #{tpu_custom_call.1} parent=5 // pred_check_branch
        %292 = sbr.rel (%p290) target = $region40
      $region39: #{tpu_custom_call.1} parent=5 // pred_region
        %s293 = ssub.s32 %s14, 2
        // Predicated region
        $region41: #{tpu_custom_call.1} parent=39 // pred_check
          %p294 = pneg %p111
        $region42: #{tpu_custom_call.1} parent=39 // pred_check_branch
          %296 = sbr.rel (%p294) target = $region44
        $region43: #{tpu_custom_call.1} parent=39 // pred_region
          %s297 = sand.u32 %s96, 1
          %s298 = scalar_lea.sflag [#allocation4], %s297
          %s299 = sand.u32 %s96, 1
          %s300 = smul.addr %s299, 32
          %s301 = scalar_lea.vmem [#allocation5], %s300
          %302 = dma.done %s298, 512
        $region44: #{tpu_custom_call.1} parent=39 // pred_fallthru
          _
      $region40: #{tpu_custom_call.1} parent=5 // pred_fallthru
        _
    $region6: #{tpu_custom_call.1} parent=1 // loop_footer
      %s18 = sadd.s32 1, %s14
    $region7: #{tpu_custom_call.1} parent=1 // loop_footer_branch
      %13 = sbr.rel target = $region3
    $region8: #{tpu_custom_call.1} parent=1 // loop_exit
      _
    %303 = vsyncpa [#allocation3], 1
    %s304 = scalar_lea.sflag [#allocation3], 1
    %305 = vsyncpa %s304, 1
    %306 = vsyncpa [#allocation4], 1
    %s307 = scalar_lea.sflag [#allocation4], 1
    %308 = vsyncpa %s307, 1

</llo_original>
